<compile_context>
chip_gen: v7x
topology: tpu7x:2x2x1
jax: 0.10.0
libtpu: 0.0.40
codegen_flags: <defaults>
</compile_context>

<pallas_src>
import functools

import jax
import jax.numpy as jnp
from jax.experimental import pallas as pl
from jax.experimental.pallas import tpu as pltpu


def _round_up(x, m):
    return ((x + m - 1) // m) * m


_VMEM_MARGIN = 2 * 1024 * 1024  # headroom for compiler-internal scratch


def _vmem_limit_bytes():
    """Per-chip scoped-VMEM limit: 75% of capacity, capped at 100 MiB,
    floored at the 32 MiB default (safe on v5e/v6e/v7x)."""
    try:
        cap = int(pltpu.get_tpu_info().vmem_capacity_bytes)
    except Exception:
        cap = 64 * 1024 * 1024  # conservative (v7x-sized) fallback
    return max(32 * 1024 * 1024, min(int(0.75 * cap), 100 * 1024 * 1024))


def _pick_tile(np_, requested):
    """Largest multiple of 128 that divides np_ and is <= requested."""
    t = min(requested, np_)
    t = max(128, (t // 128) * 128)
    while np_ % t:
        t -= 128
    return t


def _resident_fits(vmem_limit, np_, tm, tk, c_in, xw_isize,
                   out_row_bytes, extra_const_bytes):
    """Conservative VMEM estimate for the resident-XW aggregation variant.
    Assumes the pipeline double-buffers even constant-index blocks."""
    need = (2 * np_ * c_in * xw_isize      # resident XW (possibly double-buffered)
            + 2 * tm * tk * 2              # A row/k tiles (bf16, double-buffered)
            + tm * c_in * 4                # f32 accumulator scratch
            + 2 * tm * out_row_bytes       # output tile (double-buffered)
            + 2 * extra_const_bytes)       # bias / Wc constant blocks
    return need <= vmem_limit - _VMEM_MARGIN


# ----------------------------------------------------------------------------
# Kernel 1: row-tiled feature transform   out = x @ W   (W fully VMEM-resident)
# ----------------------------------------------------------------------------
def transform_kernel(x_ref, w_ref, o_ref):
    o_ref[...] = jnp.dot(
        x_ref[...], w_ref[...], preferred_element_type=jnp.float32
    ).astype(o_ref.dtype)


def feature_transform(x, w, *, tm, out_dtype, vmem_limit):
    Np, Fp = x.shape
    Cp = w.shape[1]
    flops = 2 * Np * Fp * Cp
    bytes_accessed = (x.size * x.dtype.itemsize + w.size * w.dtype.itemsize
                      + Np * Cp * jnp.dtype(out_dtype).itemsize)
    return pl.pallas_call(
        transform_kernel,
        out_shape=jax.ShapeDtypeStruct((Np, Cp), out_dtype),
        grid_spec=pltpu.PrefetchScalarGridSpec(
            num_scalar_prefetch=0,
            grid=(Np // tm,),
            in_specs=[pl.BlockSpec((tm, Fp), lambda i: (i, 0)),
                      pl.BlockSpec((Fp, Cp), lambda i: (0, 0))],
            out_specs=pl.BlockSpec((tm, Cp), lambda i: (i, 0)),
        ),
        compiler_params=pltpu.CompilerParams(
            dimension_semantics=("parallel",),
            vmem_limit_bytes=vmem_limit),
        cost_estimate=pl.CostEstimate(flops=flops, transcendentals=0,
                                      bytes_accessed=bytes_accessed),
    )(x, w)


# ----------------------------------------------------------------------------
# Shared reduction helper: pick the (tk, C) slab of XW for this k step.
# ----------------------------------------------------------------------------
def _xw_view(xw_ref, k, tk, resident):
    if resident:
        start = pl.multiple_of(k * tk, tk)
        return xw_ref[pl.ds(start, tk), :]
    return xw_ref[...]


# ----------------------------------------------------------------------------
# Kernel 2 (layer 1, fused):  hwc = relu(A @ XW1 + b1) @ Wc
#   grid = (row tiles [parallel], k tiles [arbitrary, reduction last])
#   f32 accumulator scratch; the tiny (tm,Hp)x(Hp,O2p) matmul rides free MXU
#   slack in the finalize step so h never touches HBM.
# ----------------------------------------------------------------------------
def fused_agg_kernel(a_ref, xw_ref, b1_ref, wc_ref, hwc_ref, acc_ref,
                     *, tk, xw_resident):
    k = pl.program_id(1)

    @pl.when(k == 0)
    def _():
        acc_ref[...] = jnp.zeros_like(acc_ref)

    acc_ref[...] += jnp.dot(a_ref[...], _xw_view(xw_ref, k, tk, xw_resident),
                            preferred_element_type=jnp.float32)

    @pl.when(k == pl.num_programs(1) - 1)
    def _():
        h = jnp.maximum(acc_ref[...] + b1_ref[...].astype(jnp.float32), 0.0)
        # NOTE: padded rows (>= N) hold h = relu(b1) != 0 here; this is harmless
        # only because A_hat's padded columns are zero, so those rows never
        # contribute to real outputs in the second aggregation.
        hwc_ref[...] = jnp.dot(h.astype(wc_ref.dtype), wc_ref[...],
                               preferred_element_type=jnp.float32
                               ).astype(hwc_ref.dtype)


def gcn_aggregate_fused(a, xw, b1, wc, *, tm, tk, vmem_limit):
    Np = a.shape[0]
    Hp = xw.shape[1]
    O2p = wc.shape[1]
    xw_isize = xw.dtype.itemsize
    resident = _resident_fits(vmem_limit, Np, tm, tk, Hp, xw_isize,
                              O2p * 2, Hp * 4 + Hp * O2p * wc.dtype.itemsize)
    xw_spec = (pl.BlockSpec((Np, Hp), lambda i, k: (0, 0)) if resident
               else pl.BlockSpec((tk, Hp), lambda i, k: (k, 0)))
    xw_bytes = (Np * Hp * xw_isize if resident
                else (Np // tm) * Np * Hp * xw_isize)
    flops = 2 * Np * Np * Hp + 2 * Np * Hp * O2p
    bytes_accessed = (Np * Np * a.dtype.itemsize + xw_bytes
                      + Hp * 4 + Hp * O2p * wc.dtype.itemsize + Np * O2p * 2)
    kernel = functools.partial(fused_agg_kernel, tk=tk, xw_resident=resident)
    return pl.pallas_call(
        kernel,
        out_shape=jax.ShapeDtypeStruct((Np, O2p), jnp.bfloat16),
        grid_spec=pltpu.PrefetchScalarGridSpec(
            num_scalar_prefetch=0,
            grid=(Np // tm, Np // tk),                       # reduction axis last
            in_specs=[pl.BlockSpec((tm, tk), lambda i, k: (i, k)),
                      xw_spec,
                      pl.BlockSpec((1, Hp), lambda i, k: (0, 0)),
                      pl.BlockSpec((Hp, O2p), lambda i, k: (0, 0))],
            out_specs=pl.BlockSpec((tm, O2p), lambda i, k: (i, 0)),
            scratch_shapes=[pltpu.VMEM((tm, Hp), jnp.float32)]),
        compiler_params=pltpu.CompilerParams(
            dimension_semantics=("parallel", "arbitrary"),
            vmem_limit_bytes=vmem_limit),
        cost_estimate=pl.CostEstimate(flops=flops, transcendentals=0,
                                      bytes_accessed=bytes_accessed),
    )(a, xw, b1, wc)


# ----------------------------------------------------------------------------
# Kernel 3 (layer 2):  out = A @ HWC + [bmu|bls]
# ----------------------------------------------------------------------------
def agg_kernel(a_ref, xw_ref, b_ref, o_ref, acc_ref, *, tk, xw_resident):
    k = pl.program_id(1)

    @pl.when(k == 0)
    def _():
        acc_ref[...] = jnp.zeros_like(acc_ref)

    acc_ref[...] += jnp.dot(a_ref[...], _xw_view(xw_ref, k, tk, xw_resident),
                            preferred_element_type=jnp.float32)

    @pl.when(k == pl.num_programs(1) - 1)
    def _():
        o_ref[...] = (acc_ref[...] + b_ref[...].astype(jnp.float32)
                      ).astype(o_ref.dtype)


def gcn_aggregate(a, xw, bias, *, tm, tk, out_dtype, vmem_limit):
    Np = a.shape[0]
    Cp = xw.shape[1]
    xw_isize = xw.dtype.itemsize
    out_isize = jnp.dtype(out_dtype).itemsize
    resident = _resident_fits(vmem_limit, Np, tm, tk, Cp, xw_isize,
                              Cp * out_isize, Cp * 4)
    xw_spec = (pl.BlockSpec((Np, Cp), lambda i, k: (0, 0)) if resident
               else pl.BlockSpec((tk, Cp), lambda i, k: (k, 0)))
    xw_bytes = (Np * Cp * xw_isize if resident
                else (Np // tm) * Np * Cp * xw_isize)
    flops = 2 * Np * Np * Cp
    bytes_accessed = (Np * Np * a.dtype.itemsize + xw_bytes
                      + Cp * 4 + Np * Cp * out_isize)
    kernel = functools.partial(agg_kernel, tk=tk, xw_resident=resident)
    return pl.pallas_call(
        kernel,
        out_shape=jax.ShapeDtypeStruct((Np, Cp), out_dtype),
        grid_spec=pltpu.PrefetchScalarGridSpec(
            num_scalar_prefetch=0,
            grid=(Np // tm, Np // tk),                       # reduction axis last
            in_specs=[pl.BlockSpec((tm, tk), lambda i, k: (i, k)),
                      xw_spec,
                      pl.BlockSpec((1, Cp), lambda i, k: (0, 0))],
            out_specs=pl.BlockSpec((tm, Cp), lambda i, k: (i, 0)),
            scratch_shapes=[pltpu.VMEM((tm, Cp), jnp.float32)]),
        compiler_params=pltpu.CompilerParams(
            dimension_semantics=("parallel", "arbitrary"),
            vmem_limit_bytes=vmem_limit),
        cost_estimate=pl.CostEstimate(flops=flops, transcendentals=0,
                                      bytes_accessed=bytes_accessed),
    )(a, xw, bias)


# ----------------------------------------------------------------------------
# Encoder forward (Pallas-backed)
# ----------------------------------------------------------------------------
def encoder_forward(a_pad, x, params, *, num_nodes, tm=512, tk=512):
    """Returns (mu, logstd).

    a_pad: GCN-normalized dense adjacency, already zero-padded to [Np, Np] with
           Np % 128 == 0 and cast to bf16 (build it once per graph with
           `pad_adjacency`; it is the cached quantity for a static graph).

    Precision: A, x, W1, Wc and activations are bf16 with f32 accumulation;
    mu/logstd match pure-f32 module semantics to ~1e-1 (documented choice).
    """
    N = num_nodes
    Np = a_pad.shape[0]
    assert a_pad.shape == (Np, Np) and Np % 128 == 0 and Np >= N
    F_in = x.shape[1]
    H = params["w1"].shape[1]
    O = params["wmu"].shape[1]

    f32, bf16 = jnp.float32, jnp.bfloat16
    Fp = _round_up(F_in, 128)
    Hp = _round_up(H, 128)
    O2p = _round_up(2 * O, 128)              # packed mu|logstd lane-dense width

    # Padding granularity (128) is decoupled from tile size: pick the largest
    # 128-multiple tiles that divide Np so no rows/cols are silently dropped.
    tm_e = _pick_tile(Np, tm)
    tk_e = _pick_tile(Np, tk)
    assert Np % tm_e == 0 and Np % tk_e == 0

    vmem_limit = _vmem_limit_bytes()

    # ---- zero-pad operands (lane-dense layouts, bf16 MXU operands) ----
    x_p = jnp.zeros((Np, Fp), bf16).at[:N, :F_in].set(x.astype(bf16))
    w1_p = jnp.zeros((Fp, Hp), bf16).at[:F_in, :H].set(params["w1"].astype(bf16))
    b1_p = jnp.zeros((1, Hp), f32).at[:, :H].set(params["b1"])

    wc = jnp.concatenate([params["wmu"], params["wls"]], axis=1)   # [H, 2O]
    bc = jnp.concatenate([params["bmu"], params["bls"]], axis=1)   # [1, 2O]
    wc_p = jnp.zeros((Hp, O2p), bf16).at[:H, :2 * O].set(wc.astype(bf16))
    bc_p = jnp.zeros((1, O2p), f32).at[:, :2 * O].set(bc)

    # ---- layer 1 transform (bf16 MXU): xw1 = x @ W1 ----
    xw1 = feature_transform(x_p, w1_p, tm=tm_e, out_dtype=bf16,
                            vmem_limit=vmem_limit)                  # [Np, Hp]

    # ---- layer 1 aggregation fused with layer-2 transform:
    #      hwc = relu(A @ xw1 + b1) @ [Wmu|Wls]  (h never written to HBM) ----
    hwc = gcn_aggregate_fused(a_pad, xw1, b1_p, wc_p,
                              tm=tm_e, tk=tk_e, vmem_limit=vmem_limit)  # [Np, O2p]

    # ---- layer 2 aggregation: out = A @ hwc + [bmu|bls] ----
    out = gcn_aggregate(a_pad, hwc, bc_p, tm=tm_e, tk=tk_e,
                        out_dtype=f32, vmem_limit=vmem_limit)       # [Np, O2p]

    mu = out[:N, :O]
    logstd = out[:N, O:2 * O]
    return mu, logstd


# ----------------------------------------------------------------------------
# Plain-JAX glue: build GCN-normalized dense adjacency.
# TODO(synk): the edge_index scatter (A.at[dst, src].add) has no clean Pallas
# equivalent; the normalization stays in XLA and is computed once per graph.
# ----------------------------------------------------------------------------
def gcn_norm_dense(edge_index, num_nodes):
    src, dst = edge_index[0], edge_index[1]
    adj = jnp.zeros((num_nodes, num_nodes), dtype=jnp.float32)
    adj = adj.at[dst, src].add(1.0)          # A[target, source]; parallel edges sum (PyG)
    # add_remaining_self_loops: only add a self loop where one is not present
    diag = jnp.diagonal(adj)
    adj = adj + jnp.diag(jnp.where(diag > 0, 0.0, 1.0))
    deg = jnp.sum(adj, axis=1)
    dinv = jnp.where(deg > 0, 1.0 / jnp.sqrt(deg), 0.0)
    return dinv[:, None] * adj * dinv[None, :]


def pad_adjacency(a_hat, num_nodes_padded):
    """Zero-pad + cast A_hat to the bf16 layout the kernels stream (cache this
    for a static graph; doing it per forward call wastes ~one full A stream)."""
    n = a_hat.shape[0]
    return (jnp.zeros((num_nodes_padded, num_nodes_padded), jnp.bfloat16)
            .at[:n, :n].set(a_hat.astype(jnp.bfloat16)))


def init_params(key, in_channels, hidden_channels, out_channels):
    k1, k2, k3 = jax.random.split(key, 3)

    def glorot(k, fan_in, fan_out):
        lim = jnp.sqrt(6.0 / (fan_in + fan_out))
        return jax.random.uniform(k, (fan_in, fan_out), jnp.float32, -lim, lim)

    return {
        "w1": glorot(k1, in_channels, hidden_channels),
        "b1": jnp.zeros((1, hidden_channels), jnp.float32),
        "wmu": glorot(k2, hidden_channels, out_channels),
        "bmu": jnp.zeros((1, out_channels), jnp.float32),
        "wls": glorot(k3, hidden_channels, out_channels),
        "bls": jnp.zeros((1, out_channels), jnp.float32),
    }


# ----------------------------------------------------------------------------
# References
# ----------------------------------------------------------------------------
def encoder_ref_f32(a_hat, x, p):
    h = jnp.maximum(a_hat @ (x @ p["w1"]) + p["b1"], 0.0)
    mu = a_hat @ (h @ p["wmu"]) + p["bmu"]
    ls = a_hat @ (h @ p["wls"]) + p["bls"]
    return mu, ls


def encoder_ref_mixed(a_hat, x, p):
    """Mirrors the kernel's bf16-operand / f32-accumulate numerics exactly."""
    bf16 = jnp.bfloat16
    a = a_hat.astype(bf16)
    xw1 = jnp.dot(x.astype(bf16), p["w1"].astype(bf16),
                  preferred_element_type=jnp.float32).astype(bf16)
    h = jnp.maximum(
        jnp.dot(a, xw1, preferred_element_type=jnp.float32) + p["b1"], 0.0
    ).astype(bf16)
    wc = jnp.concatenate([p["wmu"], p["wls"]], axis=1).astype(bf16)
    bc = jnp.concatenate([p["bmu"], p["bls"]], axis=1)
    hwc = jnp.dot(h, wc, preferred_element_type=jnp.float32).astype(bf16)
    out = jnp.dot(a, hwc, preferred_element_type=jnp.float32) + bc
    O = p["wmu"].shape[1]
    return out[:, :O], out[:, O:2 * O]


if __name__ == "__main__":
    key = jax.random.PRNGKey(0)
    k_feat, k_param = jax.random.split(key)

    # Small synthetic graph: 16 nodes, undirected ring
    num_nodes = 16
    in_channels, hidden_channels, out_channels = 8, 16, 4

    src = jnp.arange(num_nodes, dtype=jnp.int32)
    dst = (src + 1) % num_nodes
    edge_index = jnp.stack(
        [jnp.concatenate([src, dst]), jnp.concatenate([dst, src])], axis=0
    )  # [2, 32]

    x = jax.random.normal(k_feat, (num_nodes, in_channels), jnp.float32)
    params = init_params(k_param, in_channels, hidden_channels, out_channels)

    # Built once per (static) graph and cached.
    a_hat = gcn_norm_dense(edge_index, num_nodes)
    Np = _round_up(num_nodes, 128)
    a_pad = pad_adjacency(a_hat, Np)

    mu, logstd = encoder_forward(a_pad, x, params, num_nodes=num_nodes)
    jax.block_until_ready((mu, logstd))

    assert mu.shape == (num_nodes, out_channels)
    assert logstd.shape == (num_nodes, out_channels)

    # Tight check vs a reference with identical mixed-precision numerics
    mu_m, ls_m = encoder_ref_mixed(a_hat, x, params)
    assert jnp.allclose(mu, mu_m, atol=2e-3, rtol=2e-3)
    assert jnp.allclose(logstd, ls_m, atol=2e-3, rtol=2e-3)

    # Loose check vs pure-f32 module semantics (bf16 operands)
    mu_f, ls_f = encoder_ref_f32(a_hat, x, params)
    assert jnp.allclose(mu, mu_f, atol=1e-1, rtol=1e-1)
    assert jnp.allclose(logstd, ls_f, atol=1e-1, rtol=1e-1)

    print("KERNEL_OK")
</pallas_src>

<mosaic_0001>
module attributes {stable_mosaic.version = 11 : i64} {
  func.func @transform_kernel(%arg0: i32, %arg1: memref<128x128xbf16, #tpu.memory_space<vmem>>, %arg2: memref<128x128xbf16, #tpu.memory_space<vmem>>, %arg3: memref<128x128xbf16, #tpu.memory_space<vmem>>) attributes {dimension_semantics = [#tpu.dimension_semantics<parallel>], iteration_bounds = array<i64: 1>, scalar_prefetch = 0 : i64, scratch_operands = 0 : i64, tpu.core_type = #tpu.core_type<tc>, window_params = [{transform_indices = @transform_0, window_bounds = array<i64: 128, 128>}, {pipeline_mode = #tpu.pipeline_mode<synchronous>, transform_indices = @transform_1, window_bounds = array<i64: 128, 128>}, {transform_indices = @transform_2, window_bounds = array<i64: 128, 128>}]} {
    %c0 = arith.constant 0 : index
    %c0_0 = arith.constant 0 : index
    %0 = vector.load %arg1[%c0, %c0_0] : memref<128x128xbf16, #tpu.memory_space<vmem>>, vector<128x128xbf16>
    %c0_1 = arith.constant 0 : index
    %c0_2 = arith.constant 0 : index
    %1 = vector.load %arg2[%c0_1, %c0_2] : memref<128x128xbf16, #tpu.memory_space<vmem>>, vector<128x128xbf16>
    %cst = arith.constant dense<0.000000e+00> : vector<128x128xf32>
    %2 = tpu.matmul %0, %1, %cst {dimension_numbers = #tpu.dot_dimension_numbers<[1], [0], [0], [1], [0, 0, 1, 1], [], []>} : vector<128x128xbf16>, vector<128x128xbf16>, vector<128x128xf32> -> vector<128x128xf32>
    %3 = arith.truncf %2 : vector<128x128xf32> to vector<128x128xbf16>
    %c0_3 = arith.constant 0 : index
    %c0_4 = arith.constant 0 : index
    %4 = vector.load %arg3[%c0_3, %c0_4] : memref<128x128xbf16, #tpu.memory_space<vmem>>, vector<128x128xbf16>
    tpu.vector_store %arg3[%c0_3, %c0_4], %3 {strides = array<i32>} : memref<128x128xbf16, #tpu.memory_space<vmem>>, vector<128x128xbf16>,
    return
  }
  func.func @transform_0(%arg0: i32) -> (i32, i32) {
    %c0_i32 = arith.constant 0 : i32
    %c0_i32_0 = arith.constant 0 : i32
    return %arg0, %c0_i32 : i32, i32
  }
  func.func @transform_1(%arg0: i32) -> (i32, i32) {
    %c0_i32 = arith.constant 0 : i32
    %c0_i32_0 = arith.constant 0 : i32
    %c0_i32_1 = arith.constant 0 : i32
    return %c0_i32, %c0_i32_0 : i32, i32
  }
  func.func @transform_2(%arg0: i32) -> (i32, i32) {
    %c0_i32 = arith.constant 0 : i32
    %c0_i32_0 = arith.constant 0 : i32
    return %arg0, %c0_i32 : i32, i32
  }
}

</mosaic_0001>

<llo_original>
// kernel: tpu_custom_call.1
$region0: #{tpu_custom_call.1}
  #allocation0 [shape = 'u32[]', space=smem, size = 0x4, offset = 0x4, fixed_abs, tag = 'smem constant byte address 0x4 - core index']
  #allocation1 [shape = 'u32[144,128]{1,0:T(1,128)}', space=vmem, size = 0x12000, scoped, tag = 'internal scratch']
  %s0 = inlined_call_operand.hbm [shape: bf16[128,128], index: 0, kind: input, shape index: {}]
  %s1 = inlined_call_operand.hbm [shape: bf16[128,128], index: 1, kind: input, shape index: {}]
  %s2 = inlined_call_operand.hbm [shape: bf16[128,128], index: 2, kind: output, shape index: {}]
  %s3 = sld [smem:[#allocation0]]
  $region26: #{tpu_custom_call.1} parent=0
    _
  %s5 = ssub.s32 1, %s3
  %s6 = scalar_select 0, %s5, %s3
  $region1: #{tpu_custom_call.1} parent=0
    #allocation2 [shape = 'u8[32768]{0}', space=vmem, size = 0x8000, scoped, tag = 'input window, operand 0, single buffered']
    #allocation3 [shape = 's32[1]{0}', space=sflag, size = 0x4, scoped, tag = 'scoped memory for tpu_custom_call.1']
    #allocation4 [shape = 's32[1]{0}', space=sflag, size = 0x4, scoped, tag = 'scoped memory for tpu_custom_call.1']
    #allocation5 [shape = 'u8[32768]{0}', space=vmem, size = 0x8000, scoped, tag = 'input window, operand 1, single buffered']
    #allocation6 [shape = 's32[1]{0}', space=sflag, size = 0x4, scoped, tag = 'scoped memory for tpu_custom_call.1']
    #allocation7 [shape = 'u8[32768]{0}', space=vmem, size = 0x8000, scoped, tag = 'output window, operand 0, single buffered']
    %7 = vsyncpa [#allocation3], 0
    %8 = vsyncpa [#allocation6], 0
    %9 = vsyncpa [#allocation4], 0
    // Predicated region
    $region2: #{tpu_custom_call.1} parent=1 // pred_check
      _
    $region3: #{tpu_custom_call.1} parent=1 // pred_check_branch
      %11 = sbr.rel (0) target = $region5
    $region4: #{tpu_custom_call.1} parent=1 // pred_region
      %s13 = ssub.s32 1024, 1024
      %14 = vsyncadd [#allocation3], %s13
      %s15 = sshll.u32 [#allocation2], 4
      %s16 = int_to_ptr.vmem [resolvable:$true] %s15
      %21 = dma.hbm_to_vmem [thread:$0]  %s0, 1024, %s16, [#allocation3], 64, 64, 4
    $region5: #{tpu_custom_call.1} parent=1 // pred_fallthru
      _
    // Predicated region
    $region6: #{tpu_custom_call.1} parent=1 // pred_check
      _
    $region7: #{tpu_custom_call.1} parent=1 // pred_check_branch
      %23 = sbr.rel (0) target = $region9
    $region8: #{tpu_custom_call.1} parent=1 // pred_region
      %s25 = ssub.s32 1024, 1024
      %26 = vsyncadd [#allocation6], %s25
      %s27 = sshll.u32 [#allocation5], 4
      %s28 = int_to_ptr.vmem [resolvable:$true] %s27
      %33 = dma.hbm_to_vmem [thread:$0]  %s1, 1024, %s28, [#allocation6], 64, 64, 4
    $region9: #{tpu_custom_call.1} parent=1 // pred_fallthru
      _
    // Predicated region
    $region10: #{tpu_custom_call.1} parent=1 // pred_check
      _
    $region11: #{tpu_custom_call.1} parent=1 // pred_check_branch
      %35 = sbr.rel (0) target = $region13
    $region12: #{tpu_custom_call.1} parent=1 // pred_region
      %36 = dma.done [#allocation3], 1024
    $region13: #{tpu_custom_call.1} parent=1 // pred_fallthru
      _
    // Predicated region
    $region14: #{tpu_custom_call.1} parent=1 // pred_check
      _
    $region15: #{tpu_custom_call.1} parent=1 // pred_check_branch
      %38 = sbr.rel (0) target = $region17
    $region16: #{tpu_custom_call.1} parent=1 // pred_region
      %39 = dma.done [#allocation6], 1024
    $region17: #{tpu_custom_call.1} parent=1 // pred_fallthru
      _
    %v41 = vld [vmem:[#allocation2] sm:$0xf]
    %v42 = vld [vmem:[#allocation2 + $0x4] sm:$0xf]
    %v43 = vld [vmem:[#allocation2 + $0x8] sm:$0xf]
    %v44 = vld [vmem:[#allocation2 + $0xc] sm:$0xf]
    %v45 = vld [vmem:[#allocation2 + $0x10] sm:$0xf]
    %v46 = vld [vmem:[#allocation2 + $0x14] sm:$0xf]
    %v47 = vld [vmem:[#allocation2 + $0x18] sm:$0xf]
    %v48 = vld [vmem:[#allocation2 + $0x1c] sm:$0xf]
    %v49 = vld [vmem:[#allocation2 + $0x20] sm:$0xf]
    %v50 = vld [vmem:[#allocation2 + $0x24] sm:$0xf]
    %v51 = vld [vmem:[#allocation2 + $0x28] sm:$0xf]
    %v52 = vld [vmem:[#allocation2 + $0x2c] sm:$0xf]
    %v53 = vld [vmem:[#allocation2 + $0x30] sm:$0xf]
    %v54 = vld [vmem:[#allocation2 + $0x34] sm:$0xf]
    %v55 = vld [vmem:[#allocation2 + $0x38] sm:$0xf]
    %v56 = vld [vmem:[#allocation2 + $0x3c] sm:$0xf]
    %v57 = vld [vmem:[#allocation5] sm:$0xf]
    %v58 = vld [vmem:[#allocation5 + $0x4] sm:$0xf]
    %v59 = vld [vmem:[#allocation5 + $0x8] sm:$0xf]
    %v60 = vld [vmem:[#allocation5 + $0xc] sm:$0xf]
    %v61 = vld [vmem:[#allocation5 + $0x10] sm:$0xf]
    %v62 = vld [vmem:[#allocation5 + $0x14] sm:$0xf]
    %v63 = vld [vmem:[#allocation5 + $0x18] sm:$0xf]
    %v64 = vld [vmem:[#allocation5 + $0x1c] sm:$0xf]
    %v65 = vld [vmem:[#allocation5 + $0x20] sm:$0xf]
    %v66 = vld [vmem:[#allocation5 + $0x24] sm:$0xf]
    %v67 = vld [vmem:[#allocation5 + $0x28] sm:$0xf]
    %v68 = vld [vmem:[#allocation5 + $0x2c] sm:$0xf]
    %v69 = vld [vmem:[#allocation5 + $0x30] sm:$0xf]
    %v70 = vld [vmem:[#allocation5 + $0x34] sm:$0xf]
    %v71 = vld [vmem:[#allocation5 + $0x38] sm:$0xf]
    %v72 = vld [vmem:[#allocation5 + $0x3c] sm:$0xf]
    %v89 = vunpack.c.l.b16 %v41
    %v90 = vunpack.c.l.b16 %v42
    %v91 = vunpack.c.l.b16 %v43
    %v92 = vunpack.c.l.b16 %v44
    %v93 = vunpack.c.l.b16 %v45
    %v94 = vunpack.c.l.b16 %v46
    %v95 = vunpack.c.l.b16 %v47
    %v96 = vunpack.c.l.b16 %v48
    %v97 = vunpack.c.l.b16 %v49
    %v98 = vunpack.c.l.b16 %v50
    %v99 = vunpack.c.l.b16 %v51
    %v100 = vunpack.c.l.b16 %v52
    %v101 = vunpack.c.l.b16 %v53
    %v102 = vunpack.c.l.b16 %v54
    %v103 = vunpack.c.l.b16 %v55
    %v104 = vunpack.c.l.b16 %v56
    %v105 = vpack.c.b16 %v90, %v89
    %v106 = vpack.c.b16 %v92, %v91
    %v107 = vpack.c.b16 %v94, %v93
    %v108 = vpack.c.b16 %v96, %v95
    %v109 = vpack.c.b16 %v98, %v97
    %v110 = vpack.c.b16 %v100, %v99
    %v111 = vpack.c.b16 %v102, %v101
    %v112 = vpack.c.b16 %v104, %v103
    %v137 = vunpack.c.l.b16 %v57
    %v138 = vunpack.c.l.b16 %v58
    %v139 = vunpack.c.l.b16 %v59
    %v140 = vunpack.c.l.b16 %v60
    %v141 = vunpack.c.l.b16 %v61
    %v142 = vunpack.c.l.b16 %v62
    %v143 = vunpack.c.l.b16 %v63
    %v144 = vunpack.c.l.b16 %v64
    %v145 = vunpack.c.l.b16 %v65
    %v146 = vunpack.c.l.b16 %v66
    %v147 = vunpack.c.l.b16 %v67
    %v148 = vunpack.c.l.b16 %v68
    %v149 = vunpack.c.l.b16 %v69
    %v150 = vunpack.c.l.b16 %v70
    %v151 = vunpack.c.l.b16 %v71
    %v152 = vunpack.c.l.b16 %v72
    %v153 = vpack.c.b16 %v138, %v137
    %v154 = vpack.c.b16 %v140, %v139
    %v155 = vpack.c.b16 %v142, %v141
    %v156 = vpack.c.b16 %v144, %v143
    %v157 = vpack.c.b16 %v146, %v145
    %v158 = vpack.c.b16 %v148, %v147
    %v159 = vpack.c.b16 %v150, %v149
    %v160 = vpack.c.b16 %v152, %v151
    %169 = vmatprep.subr.bf16.mxu0 0
    %170 = vmatpush1.bf16.msra.mxu0 %v153
    %171 = vmatprep.subr.bf16.mxu0 0
    %172 = vmatpush1.bf16.msra.mxu0 %v154
    %173 = vmatprep.subr.bf16.mxu0 0
    %174 = vmatpush1.bf16.msra.mxu0 %v155
    %175 = vmatprep.subr.bf16.mxu0 0
    %176 = vmatpush1.bf16.msra.mxu0 %v156
    %177 = vmatprep.subr.bf16.mxu0 0
    %178 = vmatpush1.bf16.msra.mxu0 %v157
    %179 = vmatprep.subr.bf16.mxu0 0
    %180 = vmatpush1.bf16.msra.mxu0 %v158
    %181 = vmatprep.subr.bf16.mxu0 0
    %182 = vmatpush1.bf16.msra.mxu0 %v159
    %183 = vmatprep.subr.bf16.mxu0 0
    %184 = vmatpush1.bf16.msra.mxu0 %v160
    %185 = vmatprep.subr.bf16.mxu0 0
    %186 = vmatpush1.bf16.msra.mxu0 0
    %187 = vmatprep.subr.bf16.mxu0 0
    %188 = vmatpush1.bf16.msra.mxu0 0
    %189 = vmatprep.subr.bf16.mxu0 0
    %190 = vmatpush1.bf16.msra.mxu0 0
    %191 = vmatprep.subr.bf16.mxu0 0
    %192 = vmatpush1.bf16.msra.mxu0 0
    %193 = vmatprep.subr.bf16.mxu0 0
    %194 = vmatpush1.bf16.msra.mxu0 0
    %195 = vmatprep.subr.bf16.mxu0 0
    %196 = vmatpush1.bf16.msra.mxu0 0
    %197 = vmatprep.subr.bf16.mxu0 0
    %198 = vmatpush1.bf16.msra.mxu0 0
    %199 = vmatprep.subr.bf16.mxu0 0
    %200 = vmatpush1.bf16.msra.mxu0 0
    %201 = vmatprep.mubr.bf16.mxu0 0
    %202 = vmatmul.mubr.bf16.gmra.mrb[0].mxu0 %v105
    %v203 = vpop.f32.mrb[0].mxu0
    %v204 = vadd.f32 0.0, %v203
    %v205 = vpop.f32.mrb[0].mxu0
    %v206 = vpop.f32.mrb[0].mxu0
    %v207 = vadd.f32 0.0, %v206
    %v208 = vpop.f32.mrb[0].mxu0
    %209 = vmatprep.mubr.bf16.mxu0 0
    %210 = vmatmul.mubr.bf16.gmra.mrb[0].mxu0 %v106
    %v211 = vpop.f32.mrb[0].mxu0
    %v212 = vadd.f32 0.0, %v211
    %v213 = vpop.f32.mrb[0].mxu0
    %v214 = vpop.f32.mrb[0].mxu0
    %v215 = vadd.f32 0.0, %v214
    %v216 = vpop.f32.mrb[0].mxu0
    %217 = vmatprep.mubr.bf16.mxu0 0
    %218 = vmatmul.mubr.bf16.gmra.mrb[0].mxu0 %v107
    %v219 = vpop.f32.mrb[0].mxu0
    %v220 = vadd.f32 0.0, %v219
    %v221 = vpop.f32.mrb[0].mxu0
    %v222 = vpop.f32.mrb[0].mxu0
    %v223 = vadd.f32 0.0, %v222
    %v224 = vpop.f32.mrb[0].mxu0
    %225 = vmatprep.mubr.bf16.mxu0 0
    %226 = vmatmul.mubr.bf16.gmra.mrb[0].mxu0 %v108
    %v227 = vpop.f32.mrb[0].mxu0
    %v228 = vadd.f32 0.0, %v227
    %v229 = vpop.f32.mrb[0].mxu0
    %v230 = vpop.f32.mrb[0].mxu0
    %v231 = vadd.f32 0.0, %v230
    %v232 = vpop.f32.mrb[0].mxu0
    %233 = vmatprep.mubr.bf16.mxu0 0
    %234 = vmatmul.mubr.bf16.gmra.mrb[0].mxu0 %v109
    %v235 = vpop.f32.mrb[0].mxu0
    %v236 = vadd.f32 0.0, %v235
    %v237 = vpop.f32.mrb[0].mxu0
    %v238 = vpop.f32.mrb[0].mxu0
    %v239 = vadd.f32 0.0, %v238
    %v240 = vpop.f32.mrb[0].mxu0
    %241 = vmatprep.mubr.bf16.mxu0 0
    %242 = vmatmul.mubr.bf16.gmra.mrb[0].mxu0 %v110
    %v243 = vpop.f32.mrb[0].mxu0
    %v244 = vadd.f32 0.0, %v243
    %v245 = vpop.f32.mrb[0].mxu0
    %v246 = vpop.f32.mrb[0].mxu0
    %v247 = vadd.f32 0.0, %v246
    %v248 = vpop.f32.mrb[0].mxu0
    %249 = vmatprep.mubr.bf16.mxu0 0
    %250 = vmatmul.mubr.bf16.gmra.mrb[0].mxu0 %v111
    %v251 = vpop.f32.mrb[0].mxu0
    %v252 = vadd.f32 0.0, %v251
    %v253 = vpop.f32.mrb[0].mxu0
    %v254 = vpop.f32.mrb[0].mxu0
    %v255 = vadd.f32 0.0, %v254
    %v256 = vpop.f32.mrb[0].mxu0
    %257 = vmatprep.mubr.bf16.mxu0 0
    %258 = vmatmul.mubr.bf16.gmra.mrb[0].mxu0 %v112
    %v259 = vpop.f32.mrb[0].mxu0
    %v260 = vadd.f32 0.0, %v259
    %v261 = vpop.f32.mrb[0].mxu0
    %v262 = vpop.f32.mrb[0].mxu0
    %v263 = vadd.f32 0.0, %v262
    %v264 = vpop.f32.mrb[0].mxu0
    %265 = vdwg.mxu0
    %v266 = vpack.c.bf16 %v207, %v204
    %v267 = vpack.c.bf16 %v215, %v212
    %v268 = vpack.c.bf16 %v223, %v220
    %v269 = vpack.c.bf16 %v231, %v228
    %v270 = vpack.c.bf16 %v239, %v236
    %v271 = vpack.c.bf16 %v247, %v244
    %v272 = vpack.c.bf16 %v255, %v252
    %v273 = vpack.c.bf16 %v263, %v260
    %v282 = vunpack.c.l.b16 %v266
    %v283 = vunpack.c.h.b16 %v266
    %v284 = vunpack.c.l.b16 %v267
    %v285 = vunpack.c.h.b16 %v267
    %v286 = vunpack.c.l.b16 %v268
    %v287 = vunpack.c.h.b16 %v268
    %v288 = vunpack.c.l.b16 %v269
    %v289 = vunpack.c.h.b16 %v269
    %v290 = vunpack.c.l.b16 %v270
    %v291 = vunpack.c.h.b16 %v270
    %v292 = vunpack.c.l.b16 %v271
    %v293 = vunpack.c.h.b16 %v271
    %v294 = vunpack.c.l.b16 %v272
    %v295 = vunpack.c.h.b16 %v272
    %v296 = vunpack.c.l.b16 %v273
    %v297 = vunpack.c.h.b16 %v273
    %v298 = vpack.c.b16 %v282, %v282
    %v299 = vpack.c.b16 %v283, %v283
    %v300 = vpack.c.b16 %v284, %v284
    %v301 = vpack.c.b16 %v285, %v285
    %v302 = vpack.c.b16 %v286, %v286
    %v303 = vpack.c.b16 %v287, %v287
    %v304 = vpack.c.b16 %v288, %v288
    %v305 = vpack.c.b16 %v289, %v289
    %v306 = vpack.c.b16 %v290, %v290
    %v307 = vpack.c.b16 %v291, %v291
    %v308 = vpack.c.b16 %v292, %v292
    %v309 = vpack.c.b16 %v293, %v293
    %v310 = vpack.c.b16 %v294, %v294
    %v311 = vpack.c.b16 %v295, %v295
    %v312 = vpack.c.b16 %v296, %v296
    %v313 = vpack.c.b16 %v297, %v297
    %330 = vst [vmem:[#allocation7] sm:$0xf] %v298
    %331 = vst [vmem:[#allocation7 + $0x4] sm:$0xf] %v299
    %332 = vst [vmem:[#allocation7 + $0x8] sm:$0xf] %v300
    %333 = vst [vmem:[#allocation7 + $0xc] sm:$0xf] %v301
    %334 = vst [vmem:[#allocation7 + $0x10] sm:$0xf] %v302
    %335 = vst [vmem:[#allocation7 + $0x14] sm:$0xf] %v303
    %336 = vst [vmem:[#allocation7 + $0x18] sm:$0xf] %v304
    %337 = vst [vmem:[#allocation7 + $0x1c] sm:$0xf] %v305
    %338 = vst [vmem:[#allocation7 + $0x20] sm:$0xf] %v306
    %339 = vst [vmem:[#allocation7 + $0x24] sm:$0xf] %v307
    %340 = vst [vmem:[#allocation7 + $0x28] sm:$0xf] %v308
    %341 = vst [vmem:[#allocation7 + $0x2c] sm:$0xf] %v309
    %342 = vst [vmem:[#allocation7 + $0x30] sm:$0xf] %v310
    %343 = vst [vmem:[#allocation7 + $0x34] sm:$0xf] %v311
    %344 = vst [vmem:[#allocation7 + $0x38] sm:$0xf] %v312
    %345 = vst [vmem:[#allocation7 + $0x3c] sm:$0xf] %v313
    // Predicated region
    $region18: #{tpu_custom_call.1} parent=1 // pred_check
      _
    $region19: #{tpu_custom_call.1} parent=1 // pred_check_branch
      %347 = sbr.rel (0) target = $region21
    $region20: #{tpu_custom_call.1} parent=1 // pred_region
      %s349 = ssub.s32 1024, 1024
      %350 = vsyncadd [#allocation4], %s349
      %s351 = sshll.u32 [#allocation7], 4
      %s352 = int_to_ptr.vmem [resolvable:$true] %s351
      %357 = dma.vmem_to_hbm [thread:$0]  %s352, 1024, %s2, [#allocation4], 64, 64, 4
    $region21: #{tpu_custom_call.1} parent=1 // pred_fallthru
      _
    // Predicated region
    $region22: #{tpu_custom_call.1} parent=1 // pred_check
      _
    $region23: #{tpu_custom_call.1} parent=1 // pred_check_branch
      %359 = sbr.rel (0) target = $region25
    $region24: #{tpu_custom_call.1} parent=1 // pred_region
      %360 = dma.done [#allocation4], 1024
    $region25: #{tpu_custom_call.1} parent=1 // pred_fallthru
      _
    %361 = vsyncpa [#allocation3], 1
    %362 = vsyncpa [#allocation6], 1
    %363 = vsyncpa [#allocation4], 1

</llo_original>
